<compile_context>
chip_gen: v5e
topology: v5e:2x2
jax: 0.10.0
libtpu: 0.0.40
codegen_flags: <defaults>
</compile_context>

<pallas_src>
import functools

import jax
import jax.numpy as jnp
from jax import lax
from jax.experimental import pallas as pl
from jax.experimental.pallas import tpu as pltpu


def _triplet_kernel(a_ref, p_ref, n_ref, out_ref, acc_ref, *,
                    margin, total_b, batch_tile):
    i = pl.program_id(0)
    nt = pl.num_programs(0)

    @pl.when(i == 0)
    def _init():
        acc_ref[...] = jnp.zeros_like(acc_ref)

    a = a_ref[...].astype(jnp.float32)
    p = p_ref[...].astype(jnp.float32)
    n = n_ref[...].astype(jnp.float32)

    # Fused reduction: dp - dn = sum_f[(a-p)^2 - (a-n)^2]  (single XLU reduce).
    s = jnp.sum((a - p) ** 2 - (a - n) ** 2, axis=1, keepdims=True)   # (tb, 1)
    losses = jnp.maximum(s + jnp.float32(margin), 0.0)

    rem = total_b % batch_tile                 # static Python int
    if rem == 0:
        # Every tile is full: unmasked fast path, elementwise VPU accumulate.
        acc_ref[...] += losses
    else:
        @pl.when(i < nt - 1)
        def _interior():
            acc_ref[...] += losses

        @pl.when(i == nt - 1)
        def _tail():
            # Only the edge tile straddles row B-1; mask its padded rows
            # (after the elementwise math, so garbage VMEM cannot propagate).
            row = lax.broadcasted_iota(jnp.int32, losses.shape, 0)
            acc_ref[...] += jnp.where(row < rem, losses, 0.0)

    @pl.when(i == nt - 1)
    def _finalize():
        # Single cross-row reduce + divide by the TRUE batch size; the only
        # (sub-128-lane) store of the scalar output.
        out_ref[...] = (jnp.sum(acc_ref[...], keepdims=True)
                        * jnp.float32(1.0 / total_b))


def triplet_loss(anchor, positive, negative, margin=1.0, *, block_rows=None):
    """Pallas TPU triplet loss. anchor/positive/negative: (B, D)."""
    assert anchor.shape == positive.shape == negative.shape
    assert anchor.ndim == 2
    B, D = anchor.shape
    itemsize = jnp.dtype(anchor.dtype).itemsize

    # VMEM footprint accounting: last dim lane-pads to a multiple of 128.
    d_pad = max(128, ((D + 127) // 128) * 128)
    sublane = max(8, 32 // itemsize)           # 8 (f32), 16 (bf16), 32 (i8)

    # Target ~40 MiB pipeline footprint: 3 inputs x 2 buffers x tile, plus the
    # f32 per-row accumulator (lane-padded to 128 -> 512 B per row).
    budget = 40 * 1024 * 1024
    per_row = 3 * 2 * d_pad * itemsize + 512
    tb = budget // per_row
    tb = max(sublane, (tb // sublane) * sublane)
    if block_rows is not None:                 # test / tuning hook
        tb = block_rows
    if tb >= B:
        tb = B                                 # full-array block always legal

    num_tiles = pl.cdiv(B, tb)
    footprint = 3 * 2 * tb * d_pad * itemsize + tb * 512
    vmem_limit = min(max(int(footprint) + 8 * 1024 * 1024, 32 * 1024 * 1024),
                     56 * 1024 * 1024)         # stays under v7x's 64 MiB

    kernel = functools.partial(
        _triplet_kernel, margin=float(margin), total_b=B, batch_tile=tb)

    out = pl.pallas_call(
        kernel,
        out_shape=jax.ShapeDtypeStruct((1, 1), jnp.float32),
        grid_spec=pltpu.PrefetchScalarGridSpec(
            num_scalar_prefetch=0,
            grid=(num_tiles,),
            in_specs=[pl.BlockSpec((tb, D), lambda i: (i, 0))] * 3,
            out_specs=pl.BlockSpec((1, 1), lambda i: (0, 0)),
            scratch_shapes=[pltpu.VMEM((tb, 1), jnp.float32)],
        ),
        compiler_params=pltpu.CompilerParams(
            dimension_semantics=("arbitrary",),
            vmem_limit_bytes=vmem_limit),
        cost_estimate=pl.CostEstimate(
            flops=7 * B * D,
            transcendentals=0,
            bytes_accessed=3 * B * D * itemsize + 4),
    )(anchor, positive, negative)

    return out[0, 0]


if __name__ == "__main__":
    def ref_loss(a, p, n, margin=1.0):
        dp = jnp.sum((a - p) ** 2, axis=1)
        dn = jnp.sum((a - n) ** 2, axis=1)
        return jnp.mean(jnp.maximum(dp - dn + margin, 0.0))

    # Case 1: small embeddings (typical use of the PyTorch module) -> 1 tile.
    ka, kp, kn = jax.random.split(jax.random.PRNGKey(0), 3)
    B, D = 8, 32
    anchor = jax.random.normal(ka, (B, D), dtype=jnp.float32)
    positive = jax.random.normal(kp, (B, D), dtype=jnp.float32)
    negative = jax.random.normal(kn, (B, D), dtype=jnp.float32)
    loss = triplet_loss(anchor, positive, negative, margin=1.0)
    jax.block_until_ready(loss)
    assert jnp.allclose(loss, ref_loss(anchor, positive, negative),
                        rtol=1e-4, atol=1e-4), loss

    # Case 2: narrow D, multiple tiles with a ragged (masked) tail tile.
    k = jax.random.split(jax.random.PRNGKey(1), 3)
    a2 = jax.random.normal(k[0], (300, 32), dtype=jnp.float32)
    p2 = jax.random.normal(k[1], (300, 32), dtype=jnp.float32)
    n2 = jax.random.normal(k[2], (300, 32), dtype=jnp.float32)
    loss2 = triplet_loss(a2, p2, n2, margin=1.0, block_rows=128)
    jax.block_until_ready(loss2)
    assert jnp.allclose(loss2, ref_loss(a2, p2, n2), rtol=1e-4, atol=1e-4)

    # Case 3: wide D, evenly tiled (unmasked fast path).
    k = jax.random.split(jax.random.PRNGKey(2), 3)
    a3 = jax.random.normal(k[0], (144, 256), dtype=jnp.float32)
    p3 = jax.random.normal(k[1], (144, 256), dtype=jnp.float32)
    n3 = jax.random.normal(k[2], (144, 256), dtype=jnp.float32)
    loss3 = triplet_loss(a3, p3, n3, margin=1.0, block_rows=48)
    jax.block_until_ready(loss3)
    assert jnp.allclose(loss3, ref_loss(a3, p3, n3), rtol=1e-4, atol=1e-4)

    print("KERNEL_OK")
</pallas_src>

<mosaic_0001>
module attributes {stable_mosaic.version = 11 : i64} {
  func.func @_triplet_kernel(%arg0: i32, %arg1: memref<8x32xf32, #tpu.memory_space<vmem>>, %arg2: memref<8x32xf32, #tpu.memory_space<vmem>>, %arg3: memref<8x32xf32, #tpu.memory_space<vmem>>, %arg4: memref<1x1xf32, #tpu.memory_space<vmem>>, %arg5: memref<8x1xf32, #tpu.memory_space<vmem>>) attributes {dimension_semantics = [#tpu.dimension_semantics<arbitrary>], iteration_bounds = array<i64: 1>, scalar_prefetch = 0 : i64, scratch_operands = 1 : i64, tpu.core_type = #tpu.core_type<tc>, window_params = [{transform_indices = @transform_0, window_bounds = array<i64: 8, 32>}, {transform_indices = @transform_1, window_bounds = array<i64: 8, 32>}, {transform_indices = @transform_2, window_bounds = array<i64: 8, 32>}, {pipeline_mode = #tpu.pipeline_mode<synchronous>, transform_indices = @transform_3, window_bounds = array<i64: 1, 1>}]} {
    %c0_i32 = arith.constant 0 : i32
    %0 = arith.cmpi eq, %arg0, %c0_i32 : i32
    %1 = arith.extui %0 : i1 to i32
    %c0_i32_0 = arith.constant 0 : i32
    %2 = arith.cmpi ne, %1, %c0_i32_0 : i32
    scf.if %2 {
      %cst_14 = arith.constant 0.000000e+00 : f32
      %23 = vector.broadcast %cst_14 : f32 to vector<8x1xf32>
      %c0_15 = arith.constant 0 : index
      %c0_16 = arith.constant 0 : index
      %24 = vector.load %arg5[%c0_15, %c0_16] : memref<8x1xf32, #tpu.memory_space<vmem>>, vector<8x1xf32>
      tpu.vector_store %arg5[%c0_15, %c0_16], %23 {strides = array<i32>} : memref<8x1xf32, #tpu.memory_space<vmem>>, vector<8x1xf32>,
    } else {
    }
    %c0 = arith.constant 0 : index
    %c0_1 = arith.constant 0 : index
    %3 = vector.load %arg1[%c0, %c0_1] : memref<8x32xf32, #tpu.memory_space<vmem>>, vector<8x32xf32>
    %c0_2 = arith.constant 0 : index
    %c0_3 = arith.constant 0 : index
    %4 = vector.load %arg2[%c0_2, %c0_3] : memref<8x32xf32, #tpu.memory_space<vmem>>, vector<8x32xf32>
    %c0_4 = arith.constant 0 : index
    %c0_5 = arith.constant 0 : index
    %5 = vector.load %arg3[%c0_4, %c0_5] : memref<8x32xf32, #tpu.memory_space<vmem>>, vector<8x32xf32>
    %6 = arith.subf %3, %4 : vector<8x32xf32>
    %7 = arith.mulf %6, %6 : vector<8x32xf32>
    %8 = arith.subf %3, %5 : vector<8x32xf32>
    %9 = arith.mulf %8, %8 : vector<8x32xf32>
    %10 = arith.subf %7, %9 : vector<8x32xf32>
    %cst = arith.constant dense<0.000000e+00> : vector<8xf32>
    %11 = vector.multi_reduction <add>, %10, %cst [1] : vector<8x32xf32> to vector<8xf32>
    %12 = vector.shape_cast %11 : vector<8xf32> to vector<8x1xf32>
    %cst_6 = arith.constant 1.000000e+00 : f32
    %13 = vector.broadcast %cst_6 : f32 to vector<8x1xf32>
    %14 = arith.addf %12, %13 : vector<8x1xf32>
    %cst_7 = arith.constant 0.000000e+00 : f32
    %15 = vector.broadcast %cst_7 : f32 to vector<8x1xf32>
    %16 = arith.maximumf %14, %15 : vector<8x1xf32>
    %c0_8 = arith.constant 0 : index
    %c0_9 = arith.constant 0 : index
    %17 = vector.load %arg5[%c0_8, %c0_9] : memref<8x1xf32, #tpu.memory_space<vmem>>, vector<8x1xf32>
    %18 = arith.addf %17, %16 : vector<8x1xf32>
    %c0_10 = arith.constant 0 : index
    %c0_11 = arith.constant 0 : index
    %19 = vector.load %arg5[%c0_10, %c0_11] : memref<8x1xf32, #tpu.memory_space<vmem>>, vector<8x1xf32>
    tpu.vector_store %arg5[%c0_10, %c0_11], %18 {strides = array<i32>} : memref<8x1xf32, #tpu.memory_space<vmem>>, vector<8x1xf32>,
    %c0_i32_12 = arith.constant 0 : i32
    %20 = arith.cmpi eq, %arg0, %c0_i32_12 : i32
    %21 = arith.extui %20 : i1 to i32
    %c0_i32_13 = arith.constant 0 : i32
    %22 = arith.cmpi ne, %21, %c0_i32_13 : i32
    scf.if %22 {
      %c0_14 = arith.constant 0 : index
      %c0_15 = arith.constant 0 : index
      %23 = vector.load %arg5[%c0_14, %c0_15] : memref<8x1xf32, #tpu.memory_space<vmem>>, vector<8x1xf32>
      %24 = vector.shape_cast %23 : vector<8x1xf32> to vector<1x8x1xf32>
      %cst_16 = arith.constant dense<0.000000e+00> : vector<1xf32>
      %25 = vector.multi_reduction <add>, %24, %cst_16 [1, 2] : vector<1x8x1xf32> to vector<1xf32>
      %26 = vector.shape_cast %25 : vector<1xf32> to vector<1x1x1xf32>
      %27 = vector.extract %26[0, 0, 0] : f32 from vector<1x1x1xf32>
      %28 = vector.broadcast %27 : f32 to vector<1x1xf32>
      %cst_17 = arith.constant 1.250000e-01 : f32
      %29 = vector.broadcast %cst_17 : f32 to vector<1x1xf32>
      %30 = arith.mulf %28, %29 : vector<1x1xf32>
      %c0_18 = arith.constant 0 : index
      %c0_19 = arith.constant 0 : index
      %31 = vector.load %arg4[%c0_18, %c0_19] : memref<1x1xf32, #tpu.memory_space<vmem>>, vector<1x1xf32>
      tpu.vector_store %arg4[%c0_18, %c0_19], %30 {strides = array<i32>} : memref<1x1xf32, #tpu.memory_space<vmem>>, vector<1x1xf32>,
    } else {
    }
    return
  }
  func.func @transform_0(%arg0: i32) -> (i32, i32) {
    %c0_i32 = arith.constant 0 : i32
    %c0_i32_0 = arith.constant 0 : i32
    return %arg0, %c0_i32 : i32, i32
  }
  func.func @transform_1(%arg0: i32) -> (i32, i32) {
    %c0_i32 = arith.constant 0 : i32
    %c0_i32_0 = arith.constant 0 : i32
    return %arg0, %c0_i32 : i32, i32
  }
  func.func @transform_2(%arg0: i32) -> (i32, i32) {
    %c0_i32 = arith.constant 0 : i32
    %c0_i32_0 = arith.constant 0 : i32
    return %arg0, %c0_i32 : i32, i32
  }
  func.func @transform_3(%arg0: i32) -> (i32, i32) {
    %c0_i32 = arith.constant 0 : i32
    %c0_i32_0 = arith.constant 0 : i32
    %c0_i32_1 = arith.constant 0 : i32
    return %c0_i32, %c0_i32_0 : i32, i32
  }
}

</mosaic_0001>

<llo_original>
// kernel: tpu_custom_call.1
$region0: #{tpu_custom_call.1}
  #allocation0 [shape = 'u32[]', space=smem, size = 0x4, offset = 0x4, fixed_abs, tag = 'smem constant byte address 0x4 - core index']
  #allocation1 [shape = 'u32[72,128]{1,0:T(1,128)}', space=vmem, size = 0x9000, scoped, tag = 'internal scratch']
  #allocation2 [shape = 'f32[8,1]{1,0:T(8,128)}', space=vmem, size = 0x1000, scoped, tag = 'scratch operand']
  %s0 = inlined_call_operand.hbm [shape: f32[8,32], index: 0, kind: input, shape index: {}]
  %s1 = inlined_call_operand.hbm [shape: f32[8,32], index: 1, kind: input, shape index: {}]
  %s2 = inlined_call_operand.hbm [shape: f32[8,32], index: 2, kind: input, shape index: {}]
  %s3 = inlined_call_operand.hbm [shape: f32[1,1], index: 3, kind: output, shape index: {}]
  %s4 = sld [smem:[#allocation0]]
  $region42: #{tpu_custom_call.1} parent=0
    _
  %s6 = ssub.s32 1, %s4
  %s7 = scalar_select 0, %s6, %s4
  $region1: #{tpu_custom_call.1} parent=0
    #allocation3 [shape = 'u8[4096]{0}', space=vmem, size = 0x1000, scoped, tag = 'input window, operand 0, single buffered']
    #allocation4 [shape = 's32[1]{0}', space=sflag, size = 0x4, scoped, tag = 'scoped memory for tpu_custom_call.1']
    #allocation5 [shape = 's32[1]{0}', space=sflag, size = 0x4, scoped, tag = 'scoped memory for tpu_custom_call.1']
    #allocation6 [shape = 'u8[4096]{0}', space=vmem, size = 0x1000, scoped, tag = 'input window, operand 1, single buffered']
    #allocation7 [shape = 's32[1]{0}', space=sflag, size = 0x4, scoped, tag = 'scoped memory for tpu_custom_call.1']
    #allocation8 [shape = 'u8[4096]{0}', space=vmem, size = 0x1000, scoped, tag = 'input window, operand 2, single buffered']
    #allocation9 [shape = 'u8[512]{0}', space=vmem, size = 0x400, scoped, tag = 'output window, operand 0, single buffered']
    %8 = vsyncpa [#allocation4], 0
    %9 = vsyncpa [#allocation7], 0
    %10 = vsyncpa [#allocation5], 0
    // Predicated region
    $region2: #{tpu_custom_call.1} parent=1 // pred_check
      _
    $region3: #{tpu_custom_call.1} parent=1 // pred_check_branch
      %12 = sbr.rel (0) target = $region5
    $region4: #{tpu_custom_call.1} parent=1 // pred_region
      %14 = vsyncadd [#allocation4], 0
      %s16 = sshll.u32 %s0, 4
      %s17 = int_to_ptr.hbm [resolvable:$true] %s16
      %s18 = sshll.u32 [#allocation3], 4
      %s19 = int_to_ptr.vmem [resolvable:$true] %s18
      %21 = dma.hbm_to_vmem [thread:$0]  %s17, 128, %s19, [#allocation4]
    $region5: #{tpu_custom_call.1} parent=1 // pred_fallthru
      _
    // Predicated region
    $region6: #{tpu_custom_call.1} parent=1 // pred_check
      _
    $region7: #{tpu_custom_call.1} parent=1 // pred_check_branch
      %23 = sbr.rel (0) target = $region9
    $region8: #{tpu_custom_call.1} parent=1 // pred_region
      %25 = vsyncadd [#allocation7], 0
      %s27 = sshll.u32 %s1, 4
      %s28 = int_to_ptr.hbm [resolvable:$true] %s27
      %s29 = sshll.u32 [#allocation6], 4
      %s30 = int_to_ptr.vmem [resolvable:$true] %s29
      %32 = dma.hbm_to_vmem [thread:$0]  %s28, 128, %s30, [#allocation7]
    $region9: #{tpu_custom_call.1} parent=1 // pred_fallthru
      _
    // Predicated region
    $region10: #{tpu_custom_call.1} parent=1 // pred_check
      _
    $region11: #{tpu_custom_call.1} parent=1 // pred_check_branch
      %34 = sbr.rel (0) target = $region13
    $region12: #{tpu_custom_call.1} parent=1 // pred_region
      %36 = vsyncadd [#allocation7], 0
      %s38 = sshll.u32 %s2, 4
      %s39 = int_to_ptr.hbm [resolvable:$true] %s38
      %s40 = sshll.u32 [#allocation8], 4
      %s41 = int_to_ptr.vmem [resolvable:$true] %s40
      %43 = dma.hbm_to_vmem [thread:$0]  %s39, 128, %s41, [#allocation7]
    $region13: #{tpu_custom_call.1} parent=1 // pred_fallthru
      _
    // Predicated region
    $region14: #{tpu_custom_call.1} parent=1 // pred_check
      _
    $region15: #{tpu_custom_call.1} parent=1 // pred_check_branch
      %45 = sbr.rel (0) target = $region17
    $region16: #{tpu_custom_call.1} parent=1 // pred_region
      %47 = dma.done [#allocation4], 128
    $region17: #{tpu_custom_call.1} parent=1 // pred_fallthru
      _
    // Predicated region
    $region18: #{tpu_custom_call.1} parent=1 // pred_check
      _
    $region19: #{tpu_custom_call.1} parent=1 // pred_check_branch
      %49 = sbr.rel (0) target = $region21
    $region20: #{tpu_custom_call.1} parent=1 // pred_region
      %51 = dma.done [#allocation7], 128
    $region21: #{tpu_custom_call.1} parent=1 // pred_fallthru
      _
    // Predicated region
    $region22: #{tpu_custom_call.1} parent=1 // pred_check
      _
    $region23: #{tpu_custom_call.1} parent=1 // pred_check_branch
      %53 = sbr.rel (0) target = $region25
    $region24: #{tpu_custom_call.1} parent=1 // pred_region
      %55 = dma.done [#allocation7], 128
    $region25: #{tpu_custom_call.1} parent=1 // pred_fallthru
      _
    %p56 = scmp.eq.s32.totalorder 0, 0
    // Predicated region
    $region26: #{tpu_custom_call.1} parent=1 // pred_check
      %p57 = pneg %p56
    $region27: #{tpu_custom_call.1} parent=1 // pred_check_branch
      %59 = sbr.rel (%p57) target = $region29
    $region28: #{tpu_custom_call.1} parent=1 // pred_region
      %vm60 = vcmask 7168
      %61 = vst.msk [vmem:[#allocation2] sm:$0xff] %vm60, 0.0
    $region29: #{tpu_custom_call.1} parent=1 // pred_fallthru
      _
    %v62 = vld [vmem:[#allocation3] sm:$0xff]
    %v63 = vld [vmem:[#allocation6] sm:$0xff]
    %v64 = vld [vmem:[#allocation8] sm:$0xff]
    %v65 = vsub.f32 %v62, %v63
    %v66 = vmul.f32 %v65, %v65
    %v67 = vsub.f32 %v62, %v64
    %v68 = vmul.f32 %v67, %v67
    %v69 = vsub.f32 %v66, %v68
    %vm70 = vcmask 261120
    %v71 = vsel %vm70, %v69, 0.0
    %72 = vadd.xlane.f32.xlu0 %v71
    %v73 = vpop.xlane.xlu0 %72
    %v74 = vadd.f32 %v73, 1.0
    %v75 = vmax.f32 %v74, 0.0
    %v76 = vld [vmem:[#allocation2] sm:$0xff]
    %v77 = vadd.f32 %v76, %v75
    %vm78 = vcmask 7168
    %79 = vst.msk [vmem:[#allocation2] sm:$0xff] %vm78, %v77
    // Predicated region
    $region30: #{tpu_custom_call.1} parent=1 // pred_check
      %p80 = pneg %p56
    $region31: #{tpu_custom_call.1} parent=1 // pred_check_branch
      %82 = sbr.rel (%p80) target = $region33
    $region32: #{tpu_custom_call.1} parent=1 // pred_region
      %v83 = vld [vmem:[#allocation2] sm:$0xff]
      %v84 = vsel %vm78, %v83, 0.0
      %85 = vadd.xlane.f32.xlu0 %v84
      %v86 = vpop.xlane.xlu0 %85
      %v87 = vrot.slane %v86, 4
      %v88 = vadd.f32 %v86, %v87
      %v89 = vrot.slane %v88, 2
      %v90 = vadd.f32 %v88, %v89
      %v91 = vrot.slane %v90, 1
      %v92 = vadd.f32 %v90, %v91
      %s93 = vtos %v92
      %v94 = vstv %s93
      %v95 = vmul.f32 %v94, 0.125
      %vm96 = vcmask 0
      %97 = vst.msk [vmem:[#allocation9] sm:$0x1] %vm96, %v95
    $region33: #{tpu_custom_call.1} parent=1 // pred_fallthru
      _
    // Predicated region
    $region34: #{tpu_custom_call.1} parent=1 // pred_check
      _
    $region35: #{tpu_custom_call.1} parent=1 // pred_check_branch
      %99 = sbr.rel (0) target = $region37
    $region36: #{tpu_custom_call.1} parent=1 // pred_region
      %101 = vsyncadd [#allocation5], 0
      %s103 = sshll.u32 [#allocation9], 4
      %s104 = int_to_ptr.vmem [resolvable:$true] %s103
      %s105 = sshll.u32 %s3, 4
      %s106 = int_to_ptr.hbm [resolvable:$true] %s105
      %108 = dma.vmem_to_hbm [thread:$0]  %s104, 16, %s106, [#allocation5]
    $region37: #{tpu_custom_call.1} parent=1 // pred_fallthru
      _
    // Predicated region
    $region38: #{tpu_custom_call.1} parent=1 // pred_check
      _
    $region39: #{tpu_custom_call.1} parent=1 // pred_check_branch
      %110 = sbr.rel (0) target = $region41
    $region40: #{tpu_custom_call.1} parent=1 // pred_region
      %112 = dma.done [#allocation5], 16
    $region41: #{tpu_custom_call.1} parent=1 // pred_fallthru
      _
    %113 = vsyncpa [#allocation4], 1
    %114 = vsyncpa [#allocation7], 1
    %115 = vsyncpa [#allocation5], 1

</llo_original>
